<compile_context>
chip_gen: v5e
topology: v5e:2x2
jax: 0.10.0
libtpu: 0.0.40
codegen_flags: <defaults>
</compile_context>

<pallas_src>
import math
import jax
import jax.numpy as jnp
from jax.experimental import pallas as pl
from jax.experimental.pallas import tpu as pltpu


# ---------------------------------------------------------------------------
# kernel
# ---------------------------------------------------------------------------
def _dwconv_kernel(x_ref, top_ref, bot_ref, w_ref, b_ref, o_ref):
    """One (batch-block, H-strip, channel-tile) step of the depthwise 3x3 conv.

    x_ref:   (TB, TH, W, TC)  un-padded strip of the input
    top_ref: (TB, 1,  W, TC)  row just above the strip (garbage when s == 0)
    bot_ref: (TB, 1,  W, TC)  row just below the strip (garbage when s == last)
    w_ref:   (9, TC)          per-lane taps, row-major over (kh, kw), x.dtype
    b_ref:   (1, TC)          per-lane bias, float32 (forces f32 accumulation)
    o_ref:   (TB, TH, W, TC)
    """
    TB, TH, W, TC = x_ref.shape
    s = pl.program_id(1)
    ns = pl.num_programs(1)

    x = x_ref[...]                                     # native dtype      [R8]
    zrow = jnp.zeros((TB, 1, W, TC), dtype=x.dtype)
    top = jnp.where(s > 0, top_ref[...], zrow)         # zero halo at border
    bot = jnp.where(s < ns - 1, bot_ref[...], zrow)

    # halo'd strip (TH+2 rows): concat along H is a cheap major-dim copy  [R4]
    xh = jnp.concatenate([top, x, bot], axis=1)

    # the only two sublane-misaligned ops in the kernel                   [R1]
    zcol = jnp.zeros((TB, TH + 2, 1, TC), dtype=x.dtype)
    x_w0 = jnp.concatenate([zcol, xh[:, :, :W - 1, :]], axis=2)   # col j <- j-1
    x_w2 = jnp.concatenate([xh[:, :, 1:, :], zcol], axis=2)       # col j <- j+1
    xw = (x_w0, xh, x_w2)

    w = w_ref[...]                                     # (9, TC), native dtype
    b = b_ref[...]                                     # (1, TC), float32

    # init = centre tap + bias: no zeros pass, no separate bias pass [R2];
    # the f32 bias promotes the accumulator to f32 even for bf16 input [R8]
    acc = xw[1][:, 1:1 + TH, :, :] * w[4] + b
    for kh in range(3):
        for kw in range(3):
            if kh == 1 and kw == 1:
                continue
            # H shift = free address offset; per-lane weight broadcast (VPU MAC)
            acc = acc + xw[kw][:, kh:kh + TH, :, :] * w[kh * 3 + kw]

    o_ref[...] = acc.astype(o_ref.dtype)


# ---------------------------------------------------------------------------
# wrapper helpers
# ---------------------------------------------------------------------------
def _divisors(n):
    return [d for d in range(1, n + 1) if n % d == 0]


def _pick_fold(B, C):
    """Fold g batch samples into the lane dim so lanes carry real channels [R3]."""
    if C % 128 == 0:
        return 1
    g0 = 128 // math.gcd(C, 128)           # smallest g with (g*C) % 128 == 0
    if B % g0 == 0 and g0 * C <= 2048:
        return g0
    # no exact fold: best fold that stays <= 128 lanes; partial lanes are
    # cheaper than channel padding + an extra unpad HBM pass.
    best = 1
    for g in _divisors(B):
        if g * C <= 128:
            best = g
    return best


def _vmem_budget():
    """Per-generation working-set budget and physical VMEM [R6][R7]."""
    try:
        info = pltpu.get_tpu_info()
        phys = int(getattr(info, "vmem_capacity_bytes", 0)) or (64 << 20)
    except Exception:                       # no info available: assume v7x
        phys = 64 << 20
    return min(int(phys * 0.45), 48 << 20), phys


def _est_vmem_bytes(tb, th, W, tc, isz):
    """Per-grid-step VMEM: double-buffered blocks + in-kernel live slabs."""
    blk_in = tb * th * W * tc * isz
    blk_halo = 2 * tb * W * tc * isz
    blk_out = tb * th * W * tc * isz
    pipe = 2 * (blk_in + blk_halo + blk_out) + 2 * 10 * tc * 4
    # halo'd strip + 2 W-shifted copies (native dtype) + f32 accumulator
    live = 3 * tb * (th + 2) * W * tc * isz + tb * th * W * tc * 4
    return pipe + live


# ---------------------------------------------------------------------------
# public entry point
# ---------------------------------------------------------------------------
def dwconv_pallas(x, weight, bias, H, W):
    """x: (B, N, C) with N == H*W; weight: (C, 1, 3, 3); bias: (C,)."""
    B, N, C = x.shape
    assert N == H * W
    dtype = x.dtype
    isz = jnp.dtype(dtype).itemsize

    # ---- lane packing: fold g batch samples into the lane dim [R3] ----
    g = _pick_fold(B, C)
    Bf, L = B // g, g * C

    x_nhwc = x.reshape(B, H, W, C)
    if g > 1:
        # one transpose pass each way replaces the old 4x channel-pad + unpad
        xf = (x_nhwc.reshape(Bf, g, H, W, C)
              .transpose(0, 2, 3, 1, 4)
              .reshape(Bf, H, W, L))
    else:
        xf = x_nhwc

    # taps (C,1,3,3) -> (9, C) tap-major / channel-last, tiled over the fold;
    # kept in x.dtype so the 9 multiplies run at input precision [R8].
    w9 = weight.reshape(C, 9).T.astype(dtype)
    b1 = bias.reshape(1, C).astype(jnp.float32)   # f32 bias => f32 accumulation
    if g > 1:
        w9 = jnp.tile(w9, (1, g))
        b1 = jnp.tile(b1, (1, g))

    # ---- tiling [R5][R6][R7] ----
    budget, phys = _vmem_budget()
    TC = 128 if L % 128 == 0 else L               # prefer 128-lane tiles   [R5]

    fit = [th for th in _divisors(H)
           if _est_vmem_bytes(1, th, W, TC, isz) <= budget]
    TH = max(fit) if fit else 1
    # TODO(synk): if even TH=1 does not fit (enormous W*L rows) a W-tile axis
    # with a 1-column halo would be needed; not required for these shapes.

    MIN_STEPS, MIN_BLOCK = 8, 32 * 1024

    def _steps(tb, th):
        return (Bf // tb) * (H // th) * (L // TC)

    # shrink the H-strip while it buys grid steps and blocks stay >= 32 KiB [R5]
    for th in sorted(fit, reverse=True):
        if _steps(1, TH) >= MIN_STEPS:
            break
        if th * W * TC * isz < MIN_BLOCK:
            break
        TH = th

    # group batch samples only while blocks stay tiny and steps stay >= floor
    TB = 1
    step_floor = min(MIN_STEPS, _steps(1, TH))
    for tb in _divisors(Bf):
        if tb == 1:
            continue
        if _steps(tb, TH) < step_floor:
            break
        if _est_vmem_bytes(tb, TH, W, TC, isz) > budget:
            break
        if tb * TH * W * TC * isz > (1 << 20):
            break
        TB = tb

    grid = (Bf // TB, H // TH, L // TC)
    vmem_limit = int(min(phys, max(budget,
                                   int(1.25 * _est_vmem_bytes(TB, TH, W, TC, isz)))))

    out = pl.pallas_call(
        _dwconv_kernel,
        out_shape=jax.ShapeDtypeStruct((Bf, H, W, L), dtype),
        grid=grid,
        in_specs=[
            # current strip
            pl.BlockSpec((TB, TH, W, TC), lambda b, s, c: (b, s, 0, c)),
            # 1-row halos above/below the strip (clamped at the image border,
            # zero-masked in-kernel)                              [R4][R6]
            pl.BlockSpec((TB, 1, W, TC),
                         lambda b, s, c: (b, jnp.maximum(s * TH - 1, 0), 0, c)),
            pl.BlockSpec((TB, 1, W, TC),
                         lambda b, s, c: (b, jnp.minimum((s + 1) * TH, H - 1), 0, c)),
            pl.BlockSpec((9, TC), lambda b, s, c: (0, c)),
            pl.BlockSpec((1, TC), lambda b, s, c: (0, c)),
        ],
        out_specs=pl.BlockSpec((TB, TH, W, TC), lambda b, s, c: (b, s, 0, c)),
        compiler_params=pltpu.CompilerParams(
            dimension_semantics=("parallel", "parallel", "parallel"),
            vmem_limit_bytes=vmem_limit),                              # [R9]
    )(xf, xf, xf, w9, b1)

    # undo the batch fold (pure reshape/transpose; no channel unpad) [R3][R4]
    if g > 1:
        out = (out.reshape(Bf, H, W, g, C)
               .transpose(0, 3, 1, 2, 4)
               .reshape(B, H, W, C))
    return out.reshape(B, N, C)


# ---------------------------------------------------------------------------
# plain-JAX reference (mirrors the PyTorch NCHW depthwise conv exactly)
# ---------------------------------------------------------------------------
def dwconv_reference(x, weight, bias, H, W):
    B, N, C = x.shape
    tx = jnp.transpose(x, (0, 2, 1)).reshape(B, C, H, W)
    out = jax.lax.conv_general_dilated(
        tx, weight, window_strides=(1, 1), padding=((1, 1), (1, 1)),
        feature_group_count=C, dimension_numbers=("NCHW", "OIHW", "NCHW"),
        precision=jax.lax.Precision.HIGHEST)
    out = out + bias.reshape(1, C, 1, 1)
    return jnp.transpose(out.reshape(B, C, N), (0, 2, 1))


if __name__ == "__main__":
    # small shapes that still exercise the fold (g=4 -> 128 lanes), multiple
    # H-strips (halo path) and a multi-step grid.
    B, C, H, W = 8, 32, 16, 16
    N = H * W

    key = jax.random.PRNGKey(0)
    kx, kw, kb = jax.random.split(key, 3)

    x = jax.random.normal(kx, (B, N, C), dtype=jnp.float32)

    # deterministic Conv2d(dim, dim, 3, 1, 1, groups=dim) params:
    # weight (C, 1, 3, 3), bias (C,) — PyTorch-style uniform(-k, k), k=1/sqrt(9)
    k = 1.0 / math.sqrt(9.0)
    weight = jax.random.uniform(kw, (C, 1, 3, 3), jnp.float32, -k, k)
    bias = jax.random.uniform(kb, (C,), jnp.float32, -k, k)

    out = jax.block_until_ready(dwconv_pallas(x, weight, bias, H, W))

    ref = dwconv_reference(x, weight, bias, H, W)
    assert out.shape == (B, N, C)
    assert jnp.allclose(out, ref, atol=1e-5, rtol=1e-5)

    print("KERNEL_OK")
</pallas_src>

<mosaic_0001>
module attributes {stable_mosaic.version = 11 : i64} {
  func.func @_dwconv_kernel(%arg0: i32, %arg1: i32, %arg2: i32, %arg3: memref<1x4x16x128xf32, #tpu.memory_space<vmem>>, %arg4: memref<1x1x16x128xf32, #tpu.memory_space<vmem>>, %arg5: memref<1x1x16x128xf32, #tpu.memory_space<vmem>>, %arg6: memref<9x128xf32, #tpu.memory_space<vmem>>, %arg7: memref<1x128xf32, #tpu.memory_space<vmem>>, %arg8: memref<1x4x16x128xf32, #tpu.memory_space<vmem>>) attributes {dimension_semantics = [#tpu.dimension_semantics<parallel>, #tpu.dimension_semantics<parallel>, #tpu.dimension_semantics<parallel>], iteration_bounds = array<i64: 2, 4, 1>, scalar_prefetch = 0 : i64, scratch_operands = 0 : i64, tpu.core_type = #tpu.core_type<tc>, window_params = [{transform_indices = @transform_0, window_bounds = array<i64: 1, 4, 16, 128>}, {transform_indices = @transform_1, window_bounds = array<i64: 1, 1, 16, 128>}, {transform_indices = @transform_2, window_bounds = array<i64: 1, 1, 16, 128>}, {transform_indices = @transform_3, window_bounds = array<i64: 9, 128>}, {transform_indices = @transform_4, window_bounds = array<i64: 1, 128>}, {transform_indices = @transform_5, window_bounds = array<i64: 1, 4, 16, 128>}]} {
    %c0 = arith.constant 0 : index
    %c0_0 = arith.constant 0 : index
    %c0_1 = arith.constant 0 : index
    %c0_2 = arith.constant 0 : index
    %0 = vector.load %arg3[%c0, %c0_0, %c0_1, %c0_2] : memref<1x4x16x128xf32, #tpu.memory_space<vmem>>, vector<1x4x16x128xf32>
    %cst = arith.constant 0.000000e+00 : f32
    %1 = vector.broadcast %cst : f32 to vector<1x1x16x128xf32>
    %c0_i32 = arith.constant 0 : i32
    %2 = arith.cmpi sgt, %arg1, %c0_i32 : i32
    %c0_3 = arith.constant 0 : index
    %c0_4 = arith.constant 0 : index
    %c0_5 = arith.constant 0 : index
    %c0_6 = arith.constant 0 : index
    %3 = vector.load %arg4[%c0_3, %c0_4, %c0_5, %c0_6] : memref<1x1x16x128xf32, #tpu.memory_space<vmem>>, vector<1x1x16x128xf32>
    %4 = arith.select %2, %3, %1 : vector<1x1x16x128xf32>
    %c3_i32 = arith.constant 3 : i32
    %5 = arith.cmpi slt, %arg1, %c3_i32 : i32
    %c0_7 = arith.constant 0 : index
    %c0_8 = arith.constant 0 : index
    %c0_9 = arith.constant 0 : index
    %c0_10 = arith.constant 0 : index
    %6 = vector.load %arg5[%c0_7, %c0_8, %c0_9, %c0_10] : memref<1x1x16x128xf32, #tpu.memory_space<vmem>>, vector<1x1x16x128xf32>
    %7 = arith.select %5, %6, %1 : vector<1x1x16x128xf32>
    %8 = tpu.concatenate %4, %0, %7 in 1 : vector<1x1x16x128xf32>, vector<1x4x16x128xf32>, vector<1x1x16x128xf32> -> vector<1x6x16x128xf32>
    %cst_11 = arith.constant 0.000000e+00 : f32
    %9 = vector.broadcast %cst_11 : f32 to vector<1x6x1x128xf32>
    %10 = vector.extract_strided_slice %8 {offsets = [0, 0, 0, 0], sizes = [1, 6, 15, 128], strides = [1, 1, 1, 1]} : vector<1x6x16x128xf32> to vector<1x6x15x128xf32>
    %11 = tpu.concatenate %9, %10 in 2 : vector<1x6x1x128xf32>, vector<1x6x15x128xf32> -> vector<1x6x16x128xf32>
    %12 = vector.extract_strided_slice %8 {offsets = [0, 0, 1, 0], sizes = [1, 6, 15, 128], strides = [1, 1, 1, 1]} : vector<1x6x16x128xf32> to vector<1x6x15x128xf32>
    %13 = tpu.concatenate %12, %9 in 2 : vector<1x6x15x128xf32>, vector<1x6x1x128xf32> -> vector<1x6x16x128xf32>
    %c0_12 = arith.constant 0 : index
    %c0_13 = arith.constant 0 : index
    %14 = vector.load %arg6[%c0_12, %c0_13] : memref<9x128xf32, #tpu.memory_space<vmem>>, vector<9x128xf32>
    %c0_14 = arith.constant 0 : index
    %c0_15 = arith.constant 0 : index
    %15 = vector.load %arg7[%c0_14, %c0_15] : memref<1x128xf32, #tpu.memory_space<vmem>>, vector<1x128xf32>
    %16 = vector.extract_strided_slice %8 {offsets = [0, 1, 0, 0], sizes = [1, 4, 16, 128], strides = [1, 1, 1, 1]} : vector<1x6x16x128xf32> to vector<1x4x16x128xf32>
    %17 = vector.extract_strided_slice %14 {offsets = [4, 0], sizes = [1, 128], strides = [1, 1]} : vector<9x128xf32> to vector<1x128xf32>
    %18 = vector.shape_cast %17 : vector<1x128xf32> to vector<128xf32>
    %19 = vector.shape_cast %18 : vector<128xf32> to vector<1x1x1x128xf32>
    %20 = vector.broadcast %19 : vector<1x1x1x128xf32> to vector<1x4x16x128xf32>
    %21 = arith.mulf %16, %20 : vector<1x4x16x128xf32>
    %22 = vector.shape_cast %15 : vector<1x128xf32> to vector<1x1x1x128xf32>
    %23 = vector.broadcast %22 : vector<1x1x1x128xf32> to vector<1x4x16x128xf32>
    %24 = arith.addf %21, %23 : vector<1x4x16x128xf32>
    %25 = vector.extract_strided_slice %11 {offsets = [0, 0, 0, 0], sizes = [1, 4, 16, 128], strides = [1, 1, 1, 1]} : vector<1x6x16x128xf32> to vector<1x4x16x128xf32>
    %26 = vector.extract_strided_slice %14 {offsets = [0, 0], sizes = [1, 128], strides = [1, 1]} : vector<9x128xf32> to vector<1x128xf32>
    %27 = vector.shape_cast %26 : vector<1x128xf32> to vector<128xf32>
    %28 = vector.shape_cast %27 : vector<128xf32> to vector<1x1x1x128xf32>
    %29 = vector.broadcast %28 : vector<1x1x1x128xf32> to vector<1x4x16x128xf32>
    %30 = arith.mulf %25, %29 : vector<1x4x16x128xf32>
    %31 = arith.addf %24, %30 : vector<1x4x16x128xf32>
    %32 = vector.extract_strided_slice %8 {offsets = [0, 0, 0, 0], sizes = [1, 4, 16, 128], strides = [1, 1, 1, 1]} : vector<1x6x16x128xf32> to vector<1x4x16x128xf32>
    %33 = vector.extract_strided_slice %14 {offsets = [1, 0], sizes = [1, 128], strides = [1, 1]} : vector<9x128xf32> to vector<1x128xf32>
    %34 = vector.shape_cast %33 : vector<1x128xf32> to vector<128xf32>
    %35 = vector.shape_cast %34 : vector<128xf32> to vector<1x1x1x128xf32>
    %36 = vector.broadcast %35 : vector<1x1x1x128xf32> to vector<1x4x16x128xf32>
    %37 = arith.mulf %32, %36 : vector<1x4x16x128xf32>
    %38 = arith.addf %31, %37 : vector<1x4x16x128xf32>
    %39 = vector.extract_strided_slice %13 {offsets = [0, 0, 0, 0], sizes = [1, 4, 16, 128], strides = [1, 1, 1, 1]} : vector<1x6x16x128xf32> to vector<1x4x16x128xf32>
    %40 = vector.extract_strided_slice %14 {offsets = [2, 0], sizes = [1, 128], strides = [1, 1]} : vector<9x128xf32> to vector<1x128xf32>
    %41 = vector.shape_cast %40 : vector<1x128xf32> to vector<128xf32>
    %42 = vector.shape_cast %41 : vector<128xf32> to vector<1x1x1x128xf32>
    %43 = vector.broadcast %42 : vector<1x1x1x128xf32> to vector<1x4x16x128xf32>
    %44 = arith.mulf %39, %43 : vector<1x4x16x128xf32>
    %45 = arith.addf %38, %44 : vector<1x4x16x128xf32>
    %46 = vector.extract_strided_slice %11 {offsets = [0, 1, 0, 0], sizes = [1, 4, 16, 128], strides = [1, 1, 1, 1]} : vector<1x6x16x128xf32> to vector<1x4x16x128xf32>
    %47 = vector.extract_strided_slice %14 {offsets = [3, 0], sizes = [1, 128], strides = [1, 1]} : vector<9x128xf32> to vector<1x128xf32>
    %48 = vector.shape_cast %47 : vector<1x128xf32> to vector<128xf32>
    %49 = vector.shape_cast %48 : vector<128xf32> to vector<1x1x1x128xf32>
    %50 = vector.broadcast %49 : vector<1x1x1x128xf32> to vector<1x4x16x128xf32>
    %51 = arith.mulf %46, %50 : vector<1x4x16x128xf32>
    %52 = arith.addf %45, %51 : vector<1x4x16x128xf32>
    %53 = vector.extract_strided_slice %13 {offsets = [0, 1, 0, 0], sizes = [1, 4, 16, 128], strides = [1, 1, 1, 1]} : vector<1x6x16x128xf32> to vector<1x4x16x128xf32>
    %54 = vector.extract_strided_slice %14 {offsets = [5, 0], sizes = [1, 128], strides = [1, 1]} : vector<9x128xf32> to vector<1x128xf32>
    %55 = vector.shape_cast %54 : vector<1x128xf32> to vector<128xf32>
    %56 = vector.shape_cast %55 : vector<128xf32> to vector<1x1x1x128xf32>
    %57 = vector.broadcast %56 : vector<1x1x1x128xf32> to vector<1x4x16x128xf32>
    %58 = arith.mulf %53, %57 : vector<1x4x16x128xf32>
    %59 = arith.addf %52, %58 : vector<1x4x16x128xf32>
    %60 = vector.extract_strided_slice %11 {offsets = [0, 2, 0, 0], sizes = [1, 4, 16, 128], strides = [1, 1, 1, 1]} : vector<1x6x16x128xf32> to vector<1x4x16x128xf32>
    %61 = vector.extract_strided_slice %14 {offsets = [6, 0], sizes = [1, 128], strides = [1, 1]} : vector<9x128xf32> to vector<1x128xf32>
    %62 = vector.shape_cast %61 : vector<1x128xf32> to vector<128xf32>
    %63 = vector.shape_cast %62 : vector<128xf32> to vector<1x1x1x128xf32>
    %64 = vector.broadcast %63 : vector<1x1x1x128xf32> to vector<1x4x16x128xf32>
    %65 = arith.mulf %60, %64 : vector<1x4x16x128xf32>
    %66 = arith.addf %59, %65 : vector<1x4x16x128xf32>
    %67 = vector.extract_strided_slice %8 {offsets = [0, 2, 0, 0], sizes = [1, 4, 16, 128], strides = [1, 1, 1, 1]} : vector<1x6x16x128xf32> to vector<1x4x16x128xf32>
    %68 = vector.extract_strided_slice %14 {offsets = [7, 0], sizes = [1, 128], strides = [1, 1]} : vector<9x128xf32> to vector<1x128xf32>
    %69 = vector.shape_cast %68 : vector<1x128xf32> to vector<128xf32>
    %70 = vector.shape_cast %69 : vector<128xf32> to vector<1x1x1x128xf32>
    %71 = vector.broadcast %70 : vector<1x1x1x128xf32> to vector<1x4x16x128xf32>
    %72 = arith.mulf %67, %71 : vector<1x4x16x128xf32>
    %73 = arith.addf %66, %72 : vector<1x4x16x128xf32>
    %74 = vector.extract_strided_slice %13 {offsets = [0, 2, 0, 0], sizes = [1, 4, 16, 128], strides = [1, 1, 1, 1]} : vector<1x6x16x128xf32> to vector<1x4x16x128xf32>
    %75 = vector.extract_strided_slice %14 {offsets = [8, 0], sizes = [1, 128], strides = [1, 1]} : vector<9x128xf32> to vector<1x128xf32>
    %76 = vector.shape_cast %75 : vector<1x128xf32> to vector<128xf32>
    %77 = vector.shape_cast %76 : vector<128xf32> to vector<1x1x1x128xf32>
    %78 = vector.broadcast %77 : vector<1x1x1x128xf32> to vector<1x4x16x128xf32>
    %79 = arith.mulf %74, %78 : vector<1x4x16x128xf32>
    %80 = arith.addf %73, %79 : vector<1x4x16x128xf32>
    %c0_16 = arith.constant 0 : index
    %c0_17 = arith.constant 0 : index
    %c0_18 = arith.constant 0 : index
    %c0_19 = arith.constant 0 : index
    %81 = vector.load %arg8[%c0_16, %c0_17, %c0_18, %c0_19] : memref<1x4x16x128xf32, #tpu.memory_space<vmem>>, vector<1x4x16x128xf32>
    tpu.vector_store %arg8[%c0_16, %c0_17, %c0_18, %c0_19], %80 {strides = array<i32>} : memref<1x4x16x128xf32, #tpu.memory_space<vmem>>, vector<1x4x16x128xf32>,
    return
  }
  func.func @transform_0(%arg0: i32, %arg1: i32, %arg2: i32) -> (i32, i32, i32, i32) {
    %c0_i32 = arith.constant 0 : i32
    %c0_i32_0 = arith.constant 0 : i32
    return %arg0, %arg1, %c0_i32, %arg2 : i32, i32, i32, i32
  }
  func.func @transform_1(%arg0: i32, %arg1: i32, %arg2: i32) -> (i32, i32, i32, i32) {
    %c4_i32 = arith.constant 4 : i32
    %0 = arith.muli %arg1, %c4_i32 : i32
    %c1_i32 = arith.constant 1 : i32
    %1 = arith.subi %0, %c1_i32 : i32
    %c0_i32 = arith.constant 0 : i32
    %2 = arith.maxsi %1, %c0_i32 : i32
    %c0_i32_0 = arith.constant 0 : i32
    %c0_i32_1 = arith.constant 0 : i32
    return %arg0, %2, %c0_i32_0, %arg2 : i32, i32, i32, i32
  }
  func.func @transform_2(%arg0: i32, %arg1: i32, %arg2: i32) -> (i32, i32, i32, i32) {
    %c1_i32 = arith.constant 1 : i32
    %0 = arith.addi %arg1, %c1_i32 : i32
    %c4_i32 = arith.constant 4 : i32
    %1 = arith.muli %0, %c4_i32 : i32
    %c15_i32 = arith.constant 15 : i32
    %2 = arith.minsi %1, %c15_i32 : i32
    %c0_i32 = arith.constant 0 : i32
    %c0_i32_0 = arith.constant 0 : i32
    return %arg0, %2, %c0_i32, %arg2 : i32, i32, i32, i32
  }
  func.func @transform_3(%arg0: i32, %arg1: i32, %arg2: i32) -> (i32, i32) {
    %c0_i32 = arith.constant 0 : i32
    %c0_i32_0 = arith.constant 0 : i32
    return %c0_i32, %arg2 : i32, i32
  }
  func.func @transform_4(%arg0: i32, %arg1: i32, %arg2: i32) -> (i32, i32) {
    %c0_i32 = arith.constant 0 : i32
    %c0_i32_0 = arith.constant 0 : i32
    return %c0_i32, %arg2 : i32, i32
  }
  func.func @transform_5(%arg0: i32, %arg1: i32, %arg2: i32) -> (i32, i32, i32, i32) {
    %c0_i32 = arith.constant 0 : i32
    %c0_i32_0 = arith.constant 0 : i32
    return %arg0, %arg1, %c0_i32, %arg2 : i32, i32, i32, i32
  }
}

</mosaic_0001>

<llo_original>
// kernel: tpu_custom_call.1
$region0: #{tpu_custom_call.1}
  #allocation0 [shape = 'u32[]', space=smem, size = 0x4, offset = 0x4, fixed_abs, tag = 'smem constant byte address 0x4 - core index']
  #allocation1 [shape = 'u32[72,128]{1,0:T(1,128)}', space=vmem, size = 0x9000, scoped, tag = 'internal scratch']
  %s0 = inlined_call_operand.hbm [shape: f32[2,16,16,128], index: 0, kind: input, shape index: {}]
  %s1 = inlined_call_operand.hbm [shape: f32[2,16,16,128], index: 1, kind: input, shape index: {}]
  %s2 = inlined_call_operand.hbm [shape: f32[2,16,16,128], index: 2, kind: input, shape index: {}]
  %s3 = inlined_call_operand.hbm [shape: f32[9,128], index: 3, kind: input, shape index: {}]
  %s4 = inlined_call_operand.vmem [shape: f32[1,128], index: 4, kind: input, shape index: {}]
  %s5 = inlined_call_operand.hbm [shape: f32[2,16,16,128], index: 5, kind: output, shape index: {}]
  %s6 = sld [smem:[#allocation0]]
  $region69: #{tpu_custom_call.1} parent=0
    _
  %s8 = ssub.s32 1, %s6
  %s9 = scalar_select 0, %s8, %s6
  $region1: #{tpu_custom_call.1} parent=0
    #allocation2 [shape = 'u8[65536]{0}', space=vmem, size = 0x10000, scoped, tag = 'input window, operand 0']
    #allocation3 [shape = 's32[2]{0}', space=sflag, size = 0x8, scoped, tag = 'scoped memory for tpu_custom_call.1']
    #allocation4 [shape = 's32[2]{0}', space=sflag, size = 0x8, scoped, tag = 'scoped memory for tpu_custom_call.1']
    #allocation5 [shape = 'u8[16384]{0}', space=vmem, size = 0x4000, scoped, tag = 'input window, operand 1']
    #allocation6 [shape = 's32[2]{0}', space=sflag, size = 0x8, scoped, tag = 'scoped memory for tpu_custom_call.1']
    #allocation7 [shape = 'u8[16384]{0}', space=vmem, size = 0x4000, scoped, tag = 'input window, operand 2']
    #allocation8 [shape = 'u8[8192]{0}', space=vmem, size = 0x2000, scoped, tag = 'input window, operand 3, single buffered']
    #allocation9 [shape = 's32[1]{0}', space=sflag, size = 0x4, scoped, tag = 'scoped memory for tpu_custom_call.1']
    #allocation10 [shape = 'u8[65536]{0}', space=vmem, size = 0x10000, scoped, tag = 'output window, operand 0']
    %10 = vsyncpa [#allocation3], 0
    %s11 = scalar_lea.sflag [#allocation3], 1
    %12 = vsyncpa %s11, 0
    %13 = vsyncpa [#allocation6], 0
    %s14 = scalar_lea.sflag [#allocation6], 1
    %15 = vsyncpa %s14, 0
    %16 = vsyncpa [#allocation9], 0
    %17 = vsyncpa [#allocation4], 0
    %s18 = scalar_lea.sflag [#allocation4], 1
    %19 = vsyncpa %s18, 0
    loop: start=0, step=1, limit=10
    $region2: #{tpu_custom_call.1} parent=1 // loop_pre_header
      _
    $region3: #{tpu_custom_call.1} parent=1 // loop_header
      %s21 = sphi 0, %s25
      %p22 = scmp.ge.s32.totalorder %s21, 10
      %s28 = sphi 0, %s47
      %s29 = sphi 0, %s43
      %s30 = sphi 0, %s39
      %s31 = sphi 0, %s28
      %s32 = sphi 0, %s29
      %s33 = sphi 0, %s30
      %s34 = sphi 0, %s31
      %s35 = sphi 0, %s32
      %s36 = sphi 0, %s33
      %s54 = sphi 0, %s56
      %s57 = sphi 0, %s54
      %s58 = sphi 0, %s57
      %s74 = sphi 0, %s58
      %s92 = sphi 0, %s94
      %s95 = sphi 0, %s92
      %s96 = sphi 0, %s95
      %s112 = sphi 0, %s96
      %s130 = sphi 0, %s132
      %s133 = sphi 0, %s130
      %s134 = sphi 0, %s133
      %s150 = sphi 0, %s134
      %s156 = sphi 0, %s158
      %s159 = sphi 0, %s156
      %s160 = sphi 0, %s159
      %s176 = sphi 0, %s160
      %s182 = sphi 0, %s184
      %s185 = sphi 0, %s182
      %s186 = sphi 0, %s185
      %s202 = sphi 0, %s186
      %s212 = sphi 0, %s214
      %s215 = sphi 0, %s212
      %s216 = sphi 0, %s215
      %s232 = sphi 0, %s216
    $region4: #{tpu_custom_call.1} parent=1 // loop_header_branch
      %24 = sbr.rel (%p22) target = $region8
    $region5: #{tpu_custom_call.1} parent=1 // loop_body
      %s26 = ssub.s32 %s21, 1
      %s27 = ssub.s32 %s21, 2
      %s37 = sadd.s32 1, %s30
      %p38 = scmp.ge.s32.totalorder %s37, 1
      %s39 = scalar_select %p38, 0, %s37
      %s40 = sadd.s32 1, %s29
      %s41 = scalar_select %p38, %s40, %s29
      %p42 = scmp.ge.s32.totalorder %s41, 4
      %s43 = scalar_select %p42, 0, %s41
      %s44 = sadd.s32 1, %s28
      %s45 = scalar_select %p42, %s44, %s28
      %p46 = scmp.ge.s32.totalorder %s45, 2
      %s47 = scalar_select %p46, 0, %s45
      %s48 = ssub.s32 %s28, %s47
      %s49 = ssub.s32 %s29, %s43
      %s50 = sor.u32 %s48, %s49
      %s51 = ssub.s32 %s30, %s39
      %s52 = sor.u32 %s50, %s51
      %p53 = scmp.eq.s32.totalorder %s52, 0
      %s55 = sadd.s32 %s54, 1
      %s56 = scalar_select %p53, %s54, %s55
      %p59 = pneg %p53
      %p60 = scmp.eq.s32.totalorder %s21, 7
      %p61 = por %p59, %p60
      %p62 = scmp.ne.s32.totalorder %s54, %s57
      %p63 = scmp.eq.s32.totalorder %s21, 0
      %p64 = por %p62, %p63
      %p65 = scmp.ne.s32.totalorder %s54, %s57
      %p66 = scmp.eq.s32.totalorder %s26, 7
      %p67 = por %p65, %p66
      %p68 = scmp.ne.s32.totalorder %s57, %s58
      %p69 = scmp.eq.s32.totalorder %s26, 0
      %p70 = por %p68, %p69
      %p71 = scmp.ne.s32.totalorder %s57, %s58
      %p72 = scmp.eq.s32.totalorder %s27, 7
      %p73 = por %p71, %p72
      %p75 = scmp.ne.s32.totalorder %s58, %s74
      %p76 = scmp.eq.s32.totalorder %s27, 0
      %p77 = por %p75, %p76
      %s78 = smul.u32 %s29, 4
      %s79 = ssub.s32 %s78, 1
      %p80 = scmp.gt.s32.totalorder %s79, 0
      %s81 = scalar_select %p80, %s79, 0
      %s82 = smul.u32 %s43, 4
      %s83 = ssub.s32 %s82, 1
      %p84 = scmp.gt.s32.totalorder %s83, 0
      %s85 = scalar_select %p84, %s83, 0
      %s86 = ssub.s32 %s28, %s47
      %s87 = ssub.s32 %s81, %s85
      %s88 = sor.u32 %s86, %s87
      %s89 = ssub.s32 %s30, %s39
      %s90 = sor.u32 %s88, %s89
      %p91 = scmp.eq.s32.totalorder %s90, 0
      %s93 = sadd.s32 %s92, 1
      %s94 = scalar_select %p91, %s92, %s93
      %p97 = pneg %p91
      %p98 = scmp.eq.s32.totalorder %s21, 7
      %p99 = por %p97, %p98
      %p100 = scmp.ne.s32.totalorder %s92, %s95
      %p101 = scmp.eq.s32.totalorder %s21, 0
      %p102 = por %p100, %p101
      %p103 = scmp.ne.s32.totalorder %s92, %s95
      %p104 = scmp.eq.s32.totalorder %s26, 7
      %p105 = por %p103, %p104
      %p106 = scmp.ne.s32.totalorder %s95, %s96
      %p107 = scmp.eq.s32.totalorder %s26, 0
      %p108 = por %p106, %p107
      %p109 = scmp.ne.s32.totalorder %s95, %s96
      %p110 = scmp.eq.s32.totalorder %s27, 7
      %p111 = por %p109, %p110
      %p113 = scmp.ne.s32.totalorder %s96, %s112
      %p114 = scmp.eq.s32.totalorder %s27, 0
      %p115 = por %p113, %p114
      %s116 = sadd.s32 %s29, 1
      %s117 = smul.u32 %s116, 4
      %p118 = scmp.lt.s32.totalorder %s117, 15
      %s119 = scalar_select %p118, %s117, 15
      %s120 = sadd.s32 %s43, 1
      %s121 = smul.u32 %s120, 4
      %p122 = scmp.lt.s32.totalorder %s121, 15
      %s123 = scalar_select %p122, %s121, 15
      %s124 = ssub.s32 %s28, %s47
      %s125 = ssub.s32 %s119, %s123
      %s126 = sor.u32 %s124, %s125
      %s127 = ssub.s32 %s30, %s39
      %s128 = sor.u32 %s126, %s127
      %p129 = scmp.eq.s32.totalorder %s128, 0
      %s131 = sadd.s32 %s130, 1
      %s132 = scalar_select %p129, %s130, %s131
      %p135 = pneg %p129
      %p136 = scmp.eq.s32.totalorder %s21, 7
      %p137 = por %p135, %p136
      %p138 = scmp.ne.s32.totalorder %s130, %s133
      %p139 = scmp.eq.s32.totalorder %s21, 0
      %p140 = por %p138, %p139
      %p141 = scmp.ne.s32.totalorder %s130, %s133
      %p142 = scmp.eq.s32.totalorder %s26, 7
      %p143 = por %p141, %p142
      %p144 = scmp.ne.s32.totalorder %s133, %s134
      %p145 = scmp.eq.s32.totalorder %s26, 0
      %p146 = por %p144, %p145
      %p147 = scmp.ne.s32.totalorder %s133, %s134
      %p148 = scmp.eq.s32.totalorder %s27, 7
      %p149 = por %p147, %p148
      %p151 = scmp.ne.s32.totalorder %s134, %s150
      %p152 = scmp.eq.s32.totalorder %s27, 0
      %p153 = por %p151, %p152
      %s154 = ssub.s32 %s30, %s39
      %p155 = scmp.eq.s32.totalorder %s154, 0
      %s157 = sadd.s32 %s156, 1
      %s158 = scalar_select %p155, %s156, %s157
      %p161 = pneg %p155
      %p162 = scmp.eq.s32.totalorder %s21, 7
      %p163 = por %p161, %p162
      %p164 = scmp.ne.s32.totalorder %s156, %s159
      %p165 = scmp.eq.s32.totalorder %s21, 0
      %p166 = por %p164, %p165
      %p167 = scmp.ne.s32.totalorder %s156, %s159
      %p168 = scmp.eq.s32.totalorder %s26, 7
      %p169 = por %p167, %p168
      %p170 = scmp.ne.s32.totalorder %s159, %s160
      %p171 = scmp.eq.s32.totalorder %s26, 0
      %p172 = por %p170, %p171
      %p173 = scmp.ne.s32.totalorder %s159, %s160
      %p174 = scmp.eq.s32.totalorder %s27, 7
      %p175 = por %p173, %p174
      %p177 = scmp.ne.s32.totalorder %s160, %s176
      %p178 = scmp.eq.s32.totalorder %s27, 0
      %p179 = por %p177, %p178
      %s180 = ssub.s32 %s30, %s39
      %p181 = scmp.eq.s32.totalorder %s180, 0
      %s183 = sadd.s32 %s182, 1
      %s184 = scalar_select %p181, %s182, %s183
      %p187 = pneg %p181
      %p188 = scmp.eq.s32.totalorder %s21, 7
      %p189 = por %p187, %p188
      %p190 = scmp.ne.s32.totalorder %s182, %s185
      %p191 = scmp.eq.s32.totalorder %s21, 0
      %p192 = por %p190, %p191
      %p193 = scmp.ne.s32.totalorder %s182, %s185
      %p194 = scmp.eq.s32.totalorder %s26, 7
      %p195 = por %p193, %p194
      %p196 = scmp.ne.s32.totalorder %s185, %s186
      %p197 = scmp.eq.s32.totalorder %s26, 0
      %p198 = por %p196, %p197
      %p199 = scmp.ne.s32.totalorder %s185, %s186
      %p200 = scmp.eq.s32.totalorder %s27, 7
      %p201 = por %p199, %p200
      %p203 = scmp.ne.s32.totalorder %s186, %s202
      %p204 = scmp.eq.s32.totalorder %s27, 0
      %p205 = por %p203, %p204
      %s206 = ssub.s32 %s28, %s47
      %s207 = ssub.s32 %s29, %s43
      %s208 = sor.u32 %s206, %s207
      %s209 = ssub.s32 %s30, %s39
      %s210 = sor.u32 %s208, %s209
      %p211 = scmp.eq.s32.totalorder %s210, 0
      %s213 = sadd.s32 %s212, 1
      %s214 = scalar_select %p211, %s212, %s213
      %p217 = pneg %p211
      %p218 = scmp.eq.s32.totalorder %s21, 7
      %p219 = por %p217, %p218
      %p220 = scmp.ne.s32.totalorder %s212, %s215
      %p221 = scmp.eq.s32.totalorder %s21, 0
      %p222 = por %p220, %p221
      %p223 = scmp.ne.s32.totalorder %s212, %s215
      %p224 = scmp.eq.s32.totalorder %s26, 7
      %p225 = por %p223, %p224
      %p226 = scmp.ne.s32.totalorder %s215, %s216
      %p227 = scmp.eq.s32.totalorder %s26, 0
      %p228 = por %p226, %p227
      %p229 = scmp.ne.s32.totalorder %s215, %s216
      %p230 = scmp.eq.s32.totalorder %s27, 7
      %p231 = por %p229, %p230
      %p233 = scmp.ne.s32.totalorder %s216, %s232
      %p234 = scmp.eq.s32.totalorder %s27, 0
      %p235 = por %p233, %p234
      %p236 = scmp.le.s32.totalorder 1, %s21
      %p237 = scmp.lt.s32.totalorder %s21, 9
      %p238 = pnand %p236, %p237
      %p239 = pneg %p238
      // Predicated region
      $region9: #{tpu_custom_call.1} parent=5 // pred_check
        _
      $region10: #{tpu_custom_call.1} parent=5 // pred_check_branch
        %241 = sbr.rel (%p238) target = $region12
      $region11: #{tpu_custom_call.1} parent=5 // pred_region
        %s242 = ssub.s32 %s21, 1
        // Predicated region
        $region13: #{tpu_custom_call.1} parent=11 // pred_check
          %p243 = pneg %p172
        $region14: #{tpu_custom_call.1} parent=11 // pred_check_branch
          %245 = sbr.rel (%p243) target = $region16
        $region15: #{tpu_custom_call.1} parent=11 // pred_region
          %247 = vsyncadd [#allocation9], 0
          %s248 = smul.addr %s33, 8
          %s249 = scalar_lea.hbm %s3, %s248
          %s250 = sshll.u32 %s249, 4
          %s251 = int_to_ptr.hbm [resolvable:$true] %s250
          %s252 = sshll.u32 [#allocation8], 4
          %s253 = int_to_ptr.vmem [resolvable:$true] %s252
          %258 = dma.hbm_to_vmem [thread:$0]  %s251, 256, %s253, [#allocation9], 128, 128, 8
        $region16: #{tpu_custom_call.1} parent=11 // pred_fallthru
          _
        // Predicated region
        $region17: #{tpu_custom_call.1} parent=11 // pred_check
          %p259 = pneg %p198
        $region18: #{tpu_custom_call.1} parent=11 // pred_check_branch
          %261 = sbr.rel (%p259) target = $region20
        $region19: #{tpu_custom_call.1} parent=11 // pred_region
          %p262 = scmp.lt.s32.totalorder %s33, 0
          %s263 = scalar_select %p262, %s33, 0
          %s264 = scalar_lea.vmem %s4, %s263
        $region20: #{tpu_custom_call.1} parent=11 // pred_fallthru
          _
      $region12: #{tpu_custom_call.1} parent=5 // pred_fallthru
        _
      %p265 = scmp.lt.s32.totalorder %s21, 8
      // Predicated region
      $region21: #{tpu_custom_call.1} parent=5 // pred_check
        %p266 = pneg %p265
      $region22: #{tpu_custom_call.1} parent=5 // pred_check_branch
        %268 = sbr.rel (%p266) target = $region24
      $region23: #{tpu_custom_call.1} parent=5 // pred_region
        // Predicated region
        $region25: #{tpu_custom_call.1} parent=23 // pred_check
          %p269 = pneg %p64
        $region26: #{tpu_custom_call.1} parent=23 // pred_check_branch
          %271 = sbr.rel (%p269) target = $region28
        $region27: #{tpu_custom_call.1} parent=23 // pred_region
          %s272 = sand.u32 %s54, 1
          %s273 = scalar_lea.sflag [#allocation3], %s272
          %s274 = sand.u32 %s54, 1
          %s275 = smul.addr %s274, 64
          %s276 = scalar_lea.vmem [#allocation2], %s275
          %s277 = smul.u32 4, %s29
          %279 = vsyncadd %s273, 0
          %s280 = smul.addr %s277, 2
          %s281 = sadd.s32 %s30, %s280
          %s282 = smul.addr %s28, 32
          %s283 = sadd.s32 %s281, %s282
          %s284 = smul.addr %s283, 8
          %s285 = scalar_lea.hbm %s0, %s284
          %s286 = sshll.u32 %s285, 4
          %s287 = int_to_ptr.hbm [resolvable:$true] %s286
          %s288 = sshll.u32 %s276, 4
          %s289 = int_to_ptr.vmem [resolvable:$true] %s288
          %294 = dma.hbm_to_vmem [thread:$0]  %s287, 1024, %s289, %s273, 128, 128, 8
        $region28: #{tpu_custom_call.1} parent=23 // pred_fallthru
          _
        // Predicated region
        $region29: #{tpu_custom_call.1} parent=23 // pred_check
          %p295 = pneg %p102
        $region30: #{tpu_custom_call.1} parent=23 // pred_check_branch
          %297 = sbr.rel (%p295) target = $region32
        $region31: #{tpu_custom_call.1} parent=23 // pred_region
          %s298 = sand.u32 %s21, 1
          %s299 = scalar_lea.sflag [#allocation6], %s298
          %s300 = sand.u32 %s92, 1
          %s301 = smul.addr %s300, 16
          %s302 = scalar_lea.vmem [#allocation5], %s301
          %s303 = smul.u32 %s29, 4
          %s304 = ssub.s32 %s303, 1
          %p305 = scmp.gt.s32.totalorder %s304, 0
          %s306 = scalar_select %p305, %s304, 0
          %308 = vsyncadd %s299, 0
          %s309 = smul.addr %s306, 2
          %s310 = sadd.s32 %s30, %s309
          %s311 = smul.addr %s28, 32
          %s312 = sadd.s32 %s310, %s311
          %s313 = smul.addr %s312, 8
          %s314 = scalar_lea.hbm %s1, %s313
          %s315 = sshll.u32 %s314, 4
          %s316 = int_to_ptr.hbm [resolvable:$true] %s315
          %s317 = sshll.u32 %s302, 4
          %s318 = int_to_ptr.vmem [resolvable:$true] %s317
          %323 = dma.hbm_to_vmem [thread:$0]  %s316, 256, %s318, %s299, 128, 128, 8
        $region32: #{tpu_custom_call.1} parent=23 // pred_fallthru
          _
        // Predicated region
        $region33: #{tpu_custom_call.1} parent=23 // pred_check
          %p324 = pneg %p140
        $region34: #{tpu_custom_call.1} parent=23 // pred_check_branch
          %326 = sbr.rel (%p324) target = $region36
        $region35: #{tpu_custom_call.1} parent=23 // pred_region
          %s327 = sand.u32 %s21, 1
          %s328 = scalar_lea.sflag [#allocation6], %s327
          %s329 = sand.u32 %s130, 1
          %s330 = smul.addr %s329, 16
          %s331 = scalar_lea.vmem [#allocation7], %s330
          %s332 = sadd.s32 %s29, 1
          %s333 = smul.u32 %s332, 4
          %p334 = scmp.lt.s32.totalorder %s333, 15
          %s335 = scalar_select %p334, %s333, 15
          %337 = vsyncadd %s328, 0
          %s338 = smul.addr %s335, 2
          %s339 = sadd.s32 %s30, %s338
          %s340 = smul.addr %s28, 32
          %s341 = sadd.s32 %s339, %s340
          %s342 = smul.addr %s341, 8
          %s343 = scalar_lea.hbm %s2, %s342
          %s344 = sshll.u32 %s343, 4
          %s345 = int_to_ptr.hbm [resolvable:$true] %s344
          %s346 = sshll.u32 %s331, 4
          %s347 = int_to_ptr.vmem [resolvable:$true] %s346
          %352 = dma.hbm_to_vmem [thread:$0]  %s345, 256, %s347, %s328, 128, 128, 8
        $region36: #{tpu_custom_call.1} parent=23 // pred_fallthru
          _
      $region24: #{tpu_custom_call.1} parent=5 // pred_fallthru
        _
      %p353 = scmp.le.s32.totalorder 1, %s21
      %p354 = scmp.lt.s32.totalorder %s21, 9
      %p355 = pnand %p353, %p354
      %p356 = pneg %p355
      // Predicated region
      $region37: #{tpu_custom_call.1} parent=5 // pred_check
        _
      $region38: #{tpu_custom_call.1} parent=5 // pred_check_branch
        %358 = sbr.rel (%p355) target = $region40
      $region39: #{tpu_custom_call.1} parent=5 // pred_region
        %s359 = ssub.s32 %s21, 1
        %s360 = sand.u32 %s57, 1
        %s361 = scalar_lea.sflag [#allocation3], %s360
        %s362 = sand.u32 %s57, 1
        %s363 = smul.addr %s362, 64
        %s364 = scalar_lea.vmem [#allocation2], %s363
        // Predicated region
        $region41: #{tpu_custom_call.1} parent=39 // pred_check
          %p365 = pneg %p70
        $region42: #{tpu_custom_call.1} parent=39 // pred_check_branch
          %367 = sbr.rel (%p365) target = $region44
        $region43: #{tpu_custom_call.1} parent=39 // pred_region
          %369 = dma.done %s361, 1024
        $region44: #{tpu_custom_call.1} parent=39 // pred_fallthru
          _
        %s370 = sand.u32 %s26, 1
        %s371 = scalar_lea.sflag [#allocation6], %s370
        %s372 = sand.u32 %s95, 1
        %s373 = smul.addr %s372, 16
        %s374 = scalar_lea.vmem [#allocation5], %s373
        // Predicated region
        $region45: #{tpu_custom_call.1} parent=39 // pred_check
          %p375 = pneg %p108
        $region46: #{tpu_custom_call.1} parent=39 // pred_check_branch
          %377 = sbr.rel (%p375) target = $region48
        $region47: #{tpu_custom_call.1} parent=39 // pred_region
          %379 = dma.done %s371, 256
        $region48: #{tpu_custom_call.1} parent=39 // pred_fallthru
          _
        %s380 = sand.u32 %s26, 1
        %s381 = scalar_lea.sflag [#allocation6], %s380
        %s382 = sand.u32 %s133, 1
        %s383 = smul.addr %s382, 16
        %s384 = scalar_lea.vmem [#allocation7], %s383
        // Predicated region
        $region49: #{tpu_custom_call.1} parent=39 // pred_check
          %p385 = pneg %p146
        $region50: #{tpu_custom_call.1} parent=39 // pred_check_branch
          %387 = sbr.rel (%p385) target = $region52
        $region51: #{tpu_custom_call.1} parent=39 // pred_region
          %389 = dma.done %s381, 256
        $region52: #{tpu_custom_call.1} parent=39 // pred_fallthru
          _
        // Predicated region
        $region53: #{tpu_custom_call.1} parent=39 // pred_check
          %p390 = pneg %p172
        $region54: #{tpu_custom_call.1} parent=39 // pred_check_branch
          %392 = sbr.rel (%p390) target = $region56
        $region55: #{tpu_custom_call.1} parent=39 // pred_region
          %394 = dma.done [#allocation9], 256
        $region56: #{tpu_custom_call.1} parent=39 // pred_fallthru
          _
        %s395 = sand.u32 %s57, 1
        %s396 = scalar_lea.sflag [#allocation3], %s395
        %s397 = sand.u32 %s57, 1
        %s398 = smul.addr %s397, 64
        %s399 = scalar_lea.vmem [#allocation2], %s398
        %p400 = pneg %p70
        %p401 = pneg %p67
        %s402 = sand.u32 %s26, 1
        %s403 = scalar_lea.sflag [#allocation6], %s402
        %s404 = sand.u32 %s95, 1
        %s405 = smul.addr %s404, 16
        %s406 = scalar_lea.vmem [#allocation5], %s405
        %p407 = pneg %p108
        %p408 = pneg %p105
        %s409 = sand.u32 %s26, 1
        %s410 = scalar_lea.sflag [#allocation6], %s409
        %s411 = sand.u32 %s133, 1
        %s412 = smul.addr %s411, 16
        %s413 = scalar_lea.vmem [#allocation7], %s412
        %p414 = pneg %p146
        %p415 = pneg %p143
        %p416 = pneg %p172
        %p417 = pneg %p169
        %p418 = scmp.lt.s32.totalorder %s33, 0
        %s419 = scalar_select %p418, %s33, 0
        %s420 = scalar_lea.vmem %s4, %s419
        %p421 = pneg %p198
        %p422 = pneg %p195
        %p423 = pneg %p228
        %p424 = pneg %p225
        %s425 = sand.u32 %s215, 1
        %s426 = scalar_lea.sflag [#allocation4], %s425
        %s427 = sand.u32 %s215, 1
        %s428 = smul.addr %s427, 64
        %s429 = scalar_lea.vmem [#allocation10], %s428
        %s430 = smul.u32 4, %s32
        %s431 = smul.u32 %s32, 4
        %s432 = ssub.s32 %s431, 1
        %p433 = scmp.gt.s32.totalorder %s432, 0
        %s434 = scalar_select %p433, %s432, 0
        %s435 = sadd.s32 %s32, 1
        %s436 = smul.u32 %s435, 4
        %p437 = scmp.lt.s32.totalorder %s436, 15
        %s438 = scalar_select %p437, %s436, 15
        %p439 = scmp.lt.s32.totalorder %s33, 0
        %s440 = scalar_select %p439, %s33, 0
        %s441 = scalar_lea.vmem %s4, %s440
        %s442 = smul.u32 4, %s32
        %v443 = vld [vmem:[%s364] sm:$0xff]
        %v444 = vld [vmem:[%s364 + $0x8] sm:$0xff]
        %v445 = vld [vmem:[%s364 + $0x10] sm:$0xff]
        %v446 = vld [vmem:[%s364 + $0x18] sm:$0xff]
        %v447 = vld [vmem:[%s364 + $0x20] sm:$0xff]
        %v448 = vld [vmem:[%s364 + $0x28] sm:$0xff]
        %v449 = vld [vmem:[%s364 + $0x30] sm:$0xff]
        %v450 = vld [vmem:[%s364 + $0x38] sm:$0xff]
        %p451 = scmp.gt.s32.totalorder %s32, 0
        %v452 = vld [vmem:[%s374] sm:$0xff]
        %v453 = vld [vmem:[%s374 + $0x8] sm:$0xff]
        %s454 = scalar_select %p451, 1, 0
        %v455 = vstv %s454
        %vm456 = vcmp.eq.s32.totalorder %v455, 1
        %v457 = vsel %vm456, %v452, 0.0
        %v458 = vsel %vm456, %v453, 0.0
        %p459 = scmp.lt.s32.totalorder %s32, 3
        %v460 = vld [vmem:[%s384] sm:$0xff]
        %v461 = vld [vmem:[%s384 + $0x8] sm:$0xff]
        %s462 = scalar_select %p459, 1, 0
        %v463 = vstv %s462
        %vm464 = vcmp.eq.s32.totalorder %v463, 1
        %v465 = vsel %vm464, %v460, 0.0
        %v466 = vsel %vm464, %v461, 0.0
        %vm479 = vcmask 1040384
        %v480 = vrot.slane %v457, 7
        %v481 = vrot.slane %v458, 7
        %v482 = vsel %vm479, %v480, %v481
        %v483 = vrot.slane %v443, 7
        %v484 = vrot.slane %v444, 7
        %v485 = vsel %vm479, %v483, %v484
        %v486 = vrot.slane %v445, 7
        %v487 = vrot.slane %v446, 7
        %v488 = vsel %vm479, %v486, %v487
        %v489 = vrot.slane %v447, 7
        %v490 = vrot.slane %v448, 7
        %v491 = vsel %vm479, %v489, %v490
        %v492 = vrot.slane %v449, 7
        %v493 = vrot.slane %v450, 7
        %v494 = vsel %vm479, %v492, %v493
        %v495 = vrot.slane %v465, 7
        %v496 = vrot.slane %v466, 7
        %v497 = vsel %vm479, %v495, %v496
        %v510 = vsel %vm479, 0.0, %v480
        %v511 = vsel %vm479, 0.0, %v483
        %v512 = vsel %vm479, 0.0, %v486
        %v513 = vsel %vm479, 0.0, %v489
        %v514 = vsel %vm479, 0.0, %v492
        %v515 = vsel %vm479, 0.0, %v495
        %vm516 = vcmask 1046528
        %v517 = vrot.slane %v457, 1
        %v518 = vrot.slane %v458, 1
        %v519 = vsel %vm516, %v517, %v518
        %v520 = vrot.slane %v443, 1
        %v521 = vrot.slane %v444, 1
        %v522 = vsel %vm516, %v520, %v521
        %v523 = vrot.slane %v445, 1
        %v524 = vrot.slane %v446, 1
        %v525 = vsel %vm516, %v523, %v524
        %v526 = vrot.slane %v447, 1
        %v527 = vrot.slane %v448, 1
        %v528 = vsel %vm516, %v526, %v527
        %v529 = vrot.slane %v449, 1
        %v530 = vrot.slane %v450, 1
        %v531 = vsel %vm516, %v529, %v530
        %v532 = vrot.slane %v465, 1
        %v533 = vrot.slane %v466, 1
        %v534 = vsel %vm516, %v532, %v533
        %v547 = vsel %vm516, %v518, 0.0
        %v548 = vsel %vm516, %v521, 0.0
        %v549 = vsel %vm516, %v524, 0.0
        %v550 = vsel %vm516, %v527, 0.0
        %v551 = vsel %vm516, %v530, 0.0
        %v552 = vsel %vm516, %v533, 0.0
        %v553 = vld [vmem:[#allocation8] sm:$0xff]
        %v554 = vld [vmem:[#allocation8 + $0x8] sm:$0x1]
        %v555 = vld [vmem:[%s441] sm:$0x1]
        %v556 = vperm.slane %v553, 4
        %v557 = vmul.f32 %v443, %v556
        %v558 = vmul.f32 %v444, %v556
        %v559 = vmul.f32 %v445, %v556
        %v560 = vmul.f32 %v446, %v556
        %v561 = vmul.f32 %v447, %v556
        %v562 = vmul.f32 %v448, %v556
        %v563 = vmul.f32 %v449, %v556
        %v564 = vmul.f32 %v450, %v556
        %v566 = vperm.slane %v555, 0
        %v568 = vadd.f32 %v557, %v566
        %v569 = vadd.f32 %v558, %v566
        %v570 = vadd.f32 %v559, %v566
        %v571 = vadd.f32 %v560, %v566
        %v572 = vadd.f32 %v561, %v566
        %v573 = vadd.f32 %v562, %v566
        %v574 = vadd.f32 %v563, %v566
        %v575 = vadd.f32 %v564, %v566
        %v576 = vperm.slane %v553, 0
        %v577 = vmul.f32 %v510, %v576
        %v578 = vmul.f32 %v482, %v576
        %v579 = vmul.f32 %v511, %v576
        %v580 = vmul.f32 %v485, %v576
        %v581 = vmul.f32 %v512, %v576
        %v582 = vmul.f32 %v488, %v576
        %v583 = vmul.f32 %v513, %v576
        %v584 = vmul.f32 %v491, %v576
        %v585 = vadd.f32 %v568, %v577
        %v586 = vadd.f32 %v569, %v578
        %v587 = vadd.f32 %v570, %v579
        %v588 = vadd.f32 %v571, %v580
        %v589 = vadd.f32 %v572, %v581
        %v590 = vadd.f32 %v573, %v582
        %v591 = vadd.f32 %v574, %v583
        %v592 = vadd.f32 %v575, %v584
        %v593 = vperm.slane %v553, 1
        %v594 = vmul.f32 %v457, %v593
        %v595 = vmul.f32 %v458, %v593
        %v596 = vmul.f32 %v443, %v593
        %v597 = vmul.f32 %v444, %v593
        %v598 = vmul.f32 %v445, %v593
        %v599 = vmul.f32 %v446, %v593
        %v600 = vmul.f32 %v447, %v593
        %v601 = vmul.f32 %v448, %v593
        %v602 = vadd.f32 %v585, %v594
        %v603 = vadd.f32 %v586, %v595
        %v604 = vadd.f32 %v587, %v596
        %v605 = vadd.f32 %v588, %v597
        %v606 = vadd.f32 %v589, %v598
        %v607 = vadd.f32 %v590, %v599
        %v608 = vadd.f32 %v591, %v600
        %v609 = vadd.f32 %v592, %v601
        %v610 = vperm.slane %v553, 2
        %v611 = vmul.f32 %v519, %v610
        %v612 = vmul.f32 %v547, %v610
        %v613 = vmul.f32 %v522, %v610
        %v614 = vmul.f32 %v548, %v610
        %v615 = vmul.f32 %v525, %v610
        %v616 = vmul.f32 %v549, %v610
        %v617 = vmul.f32 %v528, %v610
        %v618 = vmul.f32 %v550, %v610
        %v619 = vadd.f32 %v602, %v611
        %v620 = vadd.f32 %v603, %v612
        %v621 = vadd.f32 %v604, %v613
        %v622 = vadd.f32 %v605, %v614
        %v623 = vadd.f32 %v606, %v615
        %v624 = vadd.f32 %v607, %v616
        %v625 = vadd.f32 %v608, %v617
        %v626 = vadd.f32 %v609, %v618
        %v627 = vperm.slane %v553, 3
        %v628 = vmul.f32 %v511, %v627
        %v629 = vmul.f32 %v485, %v627
        %v630 = vmul.f32 %v512, %v627
        %v631 = vmul.f32 %v488, %v627
        %v632 = vmul.f32 %v513, %v627
        %v633 = vmul.f32 %v491, %v627
        %v634 = vmul.f32 %v514, %v627
        %v635 = vmul.f32 %v494, %v627
        %v636 = vadd.f32 %v619, %v628
        %v637 = vadd.f32 %v620, %v629
        %v638 = vadd.f32 %v621, %v630
        %v639 = vadd.f32 %v622, %v631
        %v640 = vadd.f32 %v623, %v632
        %v641 = vadd.f32 %v624, %v633
        %v642 = vadd.f32 %v625, %v634
        %v643 = vadd.f32 %v626, %v635
        %v644 = vperm.slane %v553, 5
        %v645 = vmul.f32 %v522, %v644
        %v646 = vmul.f32 %v548, %v644
        %v647 = vmul.f32 %v525, %v644
        %v648 = vmul.f32 %v549, %v644
        %v649 = vmul.f32 %v528, %v644
        %v650 = vmul.f32 %v550, %v644
        %v651 = vmul.f32 %v531, %v644
        %v652 = vmul.f32 %v551, %v644
        %v653 = vadd.f32 %v636, %v645
        %v654 = vadd.f32 %v637, %v646
        %v655 = vadd.f32 %v638, %v647
        %v656 = vadd.f32 %v639, %v648
        %v657 = vadd.f32 %v640, %v649
        %v658 = vadd.f32 %v641, %v650
        %v659 = vadd.f32 %v642, %v651
        %v660 = vadd.f32 %v643, %v652
        %v661 = vperm.slane %v553, 6
        %v662 = vmul.f32 %v512, %v661
        %v663 = vmul.f32 %v488, %v661
        %v664 = vmul.f32 %v513, %v661
        %v665 = vmul.f32 %v491, %v661
        %v666 = vmul.f32 %v514, %v661
        %v667 = vmul.f32 %v494, %v661
        %v668 = vmul.f32 %v515, %v661
        %v669 = vmul.f32 %v497, %v661
        %v670 = vadd.f32 %v653, %v662
        %v671 = vadd.f32 %v654, %v663
        %v672 = vadd.f32 %v655, %v664
        %v673 = vadd.f32 %v656, %v665
        %v674 = vadd.f32 %v657, %v666
        %v675 = vadd.f32 %v658, %v667
        %v676 = vadd.f32 %v659, %v668
        %v677 = vadd.f32 %v660, %v669
        %v678 = vperm.slane %v553, 7
        %v679 = vmul.f32 %v445, %v678
        %v680 = vmul.f32 %v446, %v678
        %v681 = vmul.f32 %v447, %v678
        %v682 = vmul.f32 %v448, %v678
        %v683 = vmul.f32 %v449, %v678
        %v684 = vmul.f32 %v450, %v678
        %v685 = vmul.f32 %v465, %v678
        %v686 = vmul.f32 %v466, %v678
        %v687 = vadd.f32 %v670, %v679
        %v688 = vadd.f32 %v671, %v680
        %v689 = vadd.f32 %v672, %v681
        %v690 = vadd.f32 %v673, %v682
        %v691 = vadd.f32 %v674, %v683
        %v692 = vadd.f32 %v675, %v684
        %v693 = vadd.f32 %v676, %v685
        %v694 = vadd.f32 %v677, %v686
        %v695 = vperm.slane %v554, 0
        %v696 = vmul.f32 %v525, %v695
        %v697 = vmul.f32 %v549, %v695
        %v698 = vmul.f32 %v528, %v695
        %v699 = vmul.f32 %v550, %v695
        %v700 = vmul.f32 %v531, %v695
        %v701 = vmul.f32 %v551, %v695
        %v702 = vmul.f32 %v534, %v695
        %v703 = vmul.f32 %v552, %v695
        %v704 = vadd.f32 %v687, %v696
        %v705 = vadd.f32 %v688, %v697
        %v706 = vadd.f32 %v689, %v698
        %v707 = vadd.f32 %v690, %v699
        %v708 = vadd.f32 %v691, %v700
        %v709 = vadd.f32 %v692, %v701
        %v710 = vadd.f32 %v693, %v702
        %v711 = vadd.f32 %v694, %v703
        %712 = vst [vmem:[%s429] sm:$0xff] %v704
        %713 = vst [vmem:[%s429 + $0x8] sm:$0xff] %v705
        %714 = vst [vmem:[%s429 + $0x10] sm:$0xff] %v706
        %715 = vst [vmem:[%s429 + $0x18] sm:$0xff] %v707
        %716 = vst [vmem:[%s429 + $0x20] sm:$0xff] %v708
        %717 = vst [vmem:[%s429 + $0x28] sm:$0xff] %v709
        %718 = vst [vmem:[%s429 + $0x30] sm:$0xff] %v710
        %719 = vst [vmem:[%s429 + $0x38] sm:$0xff] %v711
        %s720 = sand.u32 %s215, 1
        %s721 = scalar_lea.sflag [#allocation4], %s720
        %s722 = sand.u32 %s215, 1
        %s723 = smul.addr %s722, 64
        %s724 = scalar_lea.vmem [#allocation10], %s723
        // Predicated region
        $region57: #{tpu_custom_call.1} parent=39 // pred_check
          %p725 = pneg %p225
        $region58: #{tpu_custom_call.1} parent=39 // pred_check_branch
          %727 = sbr.rel (%p725) target = $region60
        $region59: #{tpu_custom_call.1} parent=39 // pred_region
          %s728 = smul.u32 4, %s32
          %730 = vsyncadd %s721, 0
          %s731 = smul.addr %s728, 2
          %s732 = sadd.s32 %s33, %s731
          %s733 = smul.addr %s31, 32
          %s734 = sadd.s32 %s732, %s733
          %s735 = smul.addr %s734, 8
          %s736 = scalar_lea.hbm %s5, %s735
          %s737 = sshll.u32 %s724, 4
          %s738 = int_to_ptr.vmem [resolvable:$true] %s737
          %s739 = sshll.u32 %s736, 4
          %s740 = int_to_ptr.hbm [resolvable:$true] %s739
          %745 = dma.vmem_to_hbm [thread:$0]  %s738, 1024, %s740, %s721, 128, 128, 8
        $region60: #{tpu_custom_call.1} parent=39 // pred_fallthru
          _
      $region40: #{tpu_custom_call.1} parent=5 // pred_fallthru
        _
      %p746 = scmp.le.s32.totalorder 2, %s21
      // Predicated region
      $region61: #{tpu_custom_call.1} parent=5 // pred_check
        %p747 = pneg %p746
      $region62: #{tpu_custom_call.1} parent=5 // pred_check_branch
        %749 = sbr.rel (%p747) target = $region64
      $region63: #{tpu_custom_call.1} parent=5 // pred_region
        %s750 = ssub.s32 %s21, 2
        // Predicated region
        $region65: #{tpu_custom_call.1} parent=63 // pred_check
          %p751 = pneg %p231
        $region66: #{tpu_custom_call.1} parent=63 // pred_check_branch
          %753 = sbr.rel (%p751) target = $region68
        $region67: #{tpu_custom_call.1} parent=63 // pred_region
          %s754 = sand.u32 %s216, 1
          %s755 = scalar_lea.sflag [#allocation4], %s754
          %s756 = sand.u32 %s216, 1
          %s757 = smul.addr %s756, 64
          %s758 = scalar_lea.vmem [#allocation10], %s757
          %760 = dma.done %s755, 1024
        $region68: #{tpu_custom_call.1} parent=63 // pred_fallthru
          _
      $region64: #{tpu_custom_call.1} parent=5 // pred_fallthru
        _
    $region6: #{tpu_custom_call.1} parent=1 // loop_footer
      %s25 = sadd.s32 1, %s21
    $region7: #{tpu_custom_call.1} parent=1 // loop_footer_branch
      %20 = sbr.rel target = $region3
    $region8: #{tpu_custom_call.1} parent=1 // loop_exit
      _
    %761 = vsyncpa [#allocation3], 1
    %s762 = scalar_lea.sflag [#allocation3], 1
    %763 = vsyncpa %s762, 1
    %764 = vsyncpa [#allocation6], 1
    %s765 = scalar_lea.sflag [#allocation6], 1
    %766 = vsyncpa %s765, 1
    %767 = vsyncpa [#allocation9], 1
    %768 = vsyncpa [#allocation4], 1
    %s769 = scalar_lea.sflag [#allocation4], 1
    %770 = vsyncpa %s769, 1

</llo_original>
